<compile_context>
chip_gen: v6e
topology: v6e:2x2x1
jax: 0.10.0
libtpu: 0.0.40
codegen_flags: <defaults>
</compile_context>

<pallas_src>
import jax
import jax.numpy as jnp
from jax.experimental import pallas as pl
from jax.experimental.pallas import tpu as pltpu

LANES = 128
SMALL_BYTES = 1 * 1024 * 1024  # single-block fast path threshold


def _swish_kernel(x_ref, o_ref):
    x = x_ref[...]
    # swish(x) = x * sigmoid(x); compute in f32 for accuracy, cast back.
    # (Compute is free here — the kernel is HBM-bound — so no micro-opts.)
    xf = x.astype(jnp.float32)
    o_ref[...] = (xf * jax.nn.sigmoid(xf)).astype(o_ref.dtype)


def _sublane_multiple(dtype) -> int:
    # Native TPU tile second-minor size depends on packing:
    # 4-byte dtypes -> 8 sublanes, 2-byte -> 16, 1-byte -> 32.
    itemsize = jnp.dtype(dtype).itemsize
    return max(8, 32 // max(itemsize, 1))


def _round_up(x: int, m: int) -> int:
    return ((x + m - 1) // m) * m


def _chip_config():
    """Return (tile_bytes, vmem_limit_bytes, num_tensorcores) per TPU generation."""
    kind = ""
    try:
        kind = str(getattr(jax.devices()[0], "device_kind", "")).lower()
    except Exception:
        pass
    if "v7" in kind:
        # v7x: ~3.2 TB/s per-TC HBM, 64 MiB physical VMEM/TC, 2 TCs/chip.
        # 4 buffers x 8 MiB = 32 MiB would hit the scoped default, so raise it.
        return 8 * 1024 * 1024, 48 * 1024 * 1024, 2
    if "v6" in kind:
        # v6e: single TC, 1.4 TB/s HBM, 32 MiB scoped default.
        return 4 * 1024 * 1024, 24 * 1024 * 1024, 1
    if "v5p" in kind or "v4" in kind:
        # Megacore chips (2 TCs presented as one device).
        return 4 * 1024 * 1024, 24 * 1024 * 1024, 2
    # v5e / unknown: conservative (16 MiB scoped default; 4 x 2 MiB fits).
    return 2 * 1024 * 1024, 16 * 1024 * 1024, 1


def _swish_2d(x2d, dtype, itemsize, sub, tile_bytes, vmem_limit, num_cores):
    """Run the swish kernel over a lane-dense (rows, 128) slab."""
    rows = x2d.shape[0]
    total_bytes = rows * LANES * itemsize

    if total_bytes <= SMALL_BYTES:
        # Small-input fast path: single full-array block, no grid bookkeeping.
        return pl.pallas_call(
            _swish_kernel,
            out_shape=jax.ShapeDtypeStruct((rows, LANES), dtype),
            in_specs=[pl.BlockSpec((rows, LANES), lambda: (0, 0))],
            out_specs=pl.BlockSpec((rows, LANES), lambda: (0, 0)),
        )(x2d)

    # Tiled (pipelined) path.
    max_rows_per_tile = max(sub, (tile_bytes // (LANES * itemsize)) // sub * sub)

    # Always >= 2 grid steps so the writeback of step i overlaps the input DMA
    # of step i+1.  On multi-TC chips require >= 2 steps per core and round the
    # step count up to a multiple of num_cores for an even megacore split
    # (avoids a 3/2-step tail on small grids).  Single-TC chips never shrink
    # the tile below max_rows_per_tile for large inputs.
    min_steps = 2 * num_cores if num_cores > 1 else 2
    steps = max(pl.cdiv(rows, max_rows_per_tile), min_steps)
    if num_cores > 1:
        steps = _round_up(steps, num_cores)
    row_tile = min(max_rows_per_tile, max(sub, _round_up(pl.cdiv(rows, steps), sub)))
    grid = (pl.cdiv(rows, row_tile),)  # ragged last block masked by Pallas

    return pl.pallas_call(
        _swish_kernel,
        out_shape=jax.ShapeDtypeStruct((rows, LANES), dtype),
        grid_spec=pltpu.PrefetchScalarGridSpec(
            num_scalar_prefetch=0,
            grid=grid,
            in_specs=[pl.BlockSpec((row_tile, LANES), lambda i: (i, 0))],
            out_specs=pl.BlockSpec((row_tile, LANES), lambda i: (i, 0)),
        ),
        compiler_params=pltpu.CompilerParams(
            dimension_semantics=("parallel",),
            vmem_limit_bytes=vmem_limit,
        ),
    )(x2d)


def swish_pallas(x: jax.Array) -> jax.Array:
    """Elementwise swish, matching torch `x * x.sigmoid()` (out-of-place)."""
    orig_shape = x.shape
    dtype = x.dtype
    n = x.size
    if n == 0:
        return x

    itemsize = jnp.dtype(dtype).itemsize
    sub = _sublane_multiple(dtype)
    tile_bytes, vmem_limit, num_cores = _chip_config()

    x_flat = x.reshape(-1)
    n_main = (n // LANES) * LANES  # lane-aligned prefix length

    parts = []
    if n_main:
        x2d = (x_flat if n_main == n else x_flat[:n_main]).reshape(
            n_main // LANES, LANES
        )
        out2d = _swish_2d(x2d, dtype, itemsize, sub, tile_bytes, vmem_limit, num_cores)
        parts.append(out2d.reshape(-1))
    if n_main != n:
        # TODO(synk): rare corner (numel % 128 != 0) — the <128-element tail is
        # computed with plain jnp to avoid a full N-sized pad copy.
        xt = x_flat[n_main:].astype(jnp.float32)
        parts.append((xt * jax.nn.sigmoid(xt)).astype(dtype))

    out_flat = parts[0] if len(parts) == 1 else jnp.concatenate(parts)
    return out_flat.reshape(orig_shape)


if __name__ == "__main__":
    key = jax.random.PRNGKey(0)

    # Small NCHW input consistent with the module's typical use.
    x = jax.random.normal(key, (2, 4, 16, 16), dtype=jnp.float32)
    y = jax.block_until_ready(swish_pallas(x))
    y_ref = x * jax.nn.sigmoid(x)
    assert y.shape == x.shape and y.dtype == x.dtype
    assert jnp.allclose(y, y_ref, atol=1e-6, rtol=1e-6)

    # Larger input to exercise the tiled (grid) path.
    x_big = jax.random.normal(jax.random.PRNGKey(1), (4, 64, 56, 56), dtype=jnp.float32)
    y_big = jax.block_until_ready(swish_pallas(x_big))
    y_big_ref = x_big * jax.nn.sigmoid(x_big)
    assert y_big.shape == x_big.shape and y_big.dtype == x_big.dtype
    assert jnp.allclose(y_big, y_big_ref, atol=1e-6, rtol=1e-6)

    # Non-multiple-of-128 corner case (prefix kernel + jnp tail).
    x_odd = jax.random.normal(jax.random.PRNGKey(2), (3, 5, 7), dtype=jnp.float32)
    y_odd = jax.block_until_ready(swish_pallas(x_odd))
    assert jnp.allclose(y_odd, x_odd * jax.nn.sigmoid(x_odd), atol=1e-6, rtol=1e-6)

    print("KERNEL_OK")
</pallas_src>

<mosaic_0001>
module attributes {stable_mosaic.version = 11 : i64} {
  func.func @_swish_kernel(%arg0: memref<16x128xf32, #tpu.memory_space<vmem>>, %arg1: memref<16x128xf32, #tpu.memory_space<vmem>>) attributes {dimension_semantics = [], scalar_prefetch = 0 : i64, scratch_operands = 0 : i64, tpu.core_type = #tpu.core_type<tc>} {
    %c0 = arith.constant 0 : index
    %c0_0 = arith.constant 0 : index
    %0 = vector.load %arg0[%c0, %c0_0] : memref<16x128xf32, #tpu.memory_space<vmem>>, vector<16x128xf32>
    %1 = arith.negf %0 : vector<16x128xf32>
    %2 = math.exp %1 : vector<16x128xf32>
    %cst = arith.constant 1.000000e+00 : f32
    %3 = vector.broadcast %cst : f32 to vector<16x128xf32>
    %4 = arith.addf %3, %2 : vector<16x128xf32>
    %5 = arith.divf %3, %4 : vector<16x128xf32>
    %6 = arith.mulf %0, %5 : vector<16x128xf32>
    %c0_1 = arith.constant 0 : index
    %c0_2 = arith.constant 0 : index
    %7 = vector.load %arg1[%c0_1, %c0_2] : memref<16x128xf32, #tpu.memory_space<vmem>>, vector<16x128xf32>
    tpu.vector_store %arg1[%c0_1, %c0_2], %6 {strides = array<i32>} : memref<16x128xf32, #tpu.memory_space<vmem>>, vector<16x128xf32>,
    return
  }
}

</mosaic_0001>

<llo_original>
// kernel: tpu_custom_call.1
$region0: #{tpu_custom_call.1}
  #allocation0 [shape = 'u32[]', space=smem, size = 0x4, offset = 0x4, fixed_abs, tag = 'smem constant byte address 0x4 - core index']
  #allocation1 [shape = 'u32[144,128]{1,0:T(1,128)}', space=vmem, size = 0x12000, scoped, tag = 'internal scratch']
  %s0 = inlined_call_operand.hbm [shape: f32[16,128], index: 0, kind: input, shape index: {}]
  %s1 = inlined_call_operand.hbm [shape: f32[16,128], index: 1, kind: output, shape index: {}]
  %s2 = sld [smem:[#allocation0]]
  $region18: #{tpu_custom_call.1} parent=0
    _
  %s4 = ssub.s32 1, %s2
  %s5 = scalar_select 0, %s4, %s2
  $region1: #{tpu_custom_call.1} parent=0
    #allocation2 [shape = 'u8[8192]{0}', space=vmem, size = 0x2000, scoped, tag = 'input window, operand 0, single buffered']
    #allocation3 [shape = 's32[1]{0}', space=sflag, size = 0x4, scoped, tag = 'scoped memory for tpu_custom_call.1']
    #allocation4 [shape = 's32[1]{0}', space=sflag, size = 0x4, scoped, tag = 'scoped memory for tpu_custom_call.1']
    #allocation5 [shape = 'u8[8192]{0}', space=vmem, size = 0x2000, scoped, tag = 'output window, operand 0, single buffered']
    %6 = vsyncpa [#allocation3], 0
    %7 = vsyncpa [#allocation4], 0
    // Predicated region
    $region2: #{tpu_custom_call.1} parent=1 // pred_check
      _
    $region3: #{tpu_custom_call.1} parent=1 // pred_check_branch
      %9 = sbr.rel (0) target = $region5
    $region4: #{tpu_custom_call.1} parent=1 // pred_region
      %s11 = ssub.s32 256, 256
      %12 = vsyncadd [#allocation3], %s11
      %s13 = sshll.u32 [#allocation2], 4
      %s14 = int_to_ptr.vmem [resolvable:$true] %s13
      %19 = dma.hbm_to_vmem [thread:$0]  %s0, 256, %s14, [#allocation3], 128, 128, 8
    $region5: #{tpu_custom_call.1} parent=1 // pred_fallthru
      _
    // Predicated region
    $region6: #{tpu_custom_call.1} parent=1 // pred_check
      _
    $region7: #{tpu_custom_call.1} parent=1 // pred_check_branch
      %21 = sbr.rel (0) target = $region9
    $region8: #{tpu_custom_call.1} parent=1 // pred_region
      %22 = dma.done [#allocation3], 256
    $region9: #{tpu_custom_call.1} parent=1 // pred_fallthru
      _
    %v23 = vld [vmem:[#allocation2] sm:$0xff]
    %v24 = vld [vmem:[#allocation2 + $0x8] sm:$0xff]
    %v25 = vxor.u32 %v23, 2147483648
    %v26 = vxor.u32 %v24, 2147483648
    %v27 = vmul.f32 %v25, 1.442695
    %v28 = vpow.pop %v27
    %v29 = vmul.f32 %v26, 1.442695
    %v30 = vpow.pop %v29
    %v31 = vadd.f32 %v28, 1.0
    %v32 = vadd.f32 %v30, 1.0
    %v33 = vrcp.pop %v31
    %v34 = vmul.f32 1.0, %v33
    %v35 = vrcp.pop %v32
    %v36 = vmul.f32 1.0, %v35
    %v37 = vmul.f32 %v23, %v34
    %v38 = vmul.f32 %v24, %v36
    %39 = vst [vmem:[#allocation5] sm:$0xff] %v37
    %40 = vst [vmem:[#allocation5 + $0x8] sm:$0xff] %v38
    // Predicated region
    $region10: #{tpu_custom_call.1} parent=1 // pred_check
      _
    $region11: #{tpu_custom_call.1} parent=1 // pred_check_branch
      %42 = sbr.rel (0) target = $region13
    $region12: #{tpu_custom_call.1} parent=1 // pred_region
      %s44 = ssub.s32 256, 256
      %45 = vsyncadd [#allocation4], %s44
      %s46 = sshll.u32 [#allocation5], 4
      %s47 = int_to_ptr.vmem [resolvable:$true] %s46
      %52 = dma.vmem_to_hbm [thread:$0]  %s47, 256, %s1, [#allocation4], 128, 128, 8
    $region13: #{tpu_custom_call.1} parent=1 // pred_fallthru
      _
    // Predicated region
    $region14: #{tpu_custom_call.1} parent=1 // pred_check
      _
    $region15: #{tpu_custom_call.1} parent=1 // pred_check_branch
      %54 = sbr.rel (0) target = $region17
    $region16: #{tpu_custom_call.1} parent=1 // pred_region
      %55 = dma.done [#allocation4], 256
    $region17: #{tpu_custom_call.1} parent=1 // pred_fallthru
      _
    %56 = vsyncpa [#allocation3], 1
    %57 = vsyncpa [#allocation4], 1

</llo_original>
